<compile_context>
chip_gen: v7x
topology: tpu7x:2x2x1
jax: 0.10.0
libtpu: 0.0.40
codegen_flags: <defaults>
</compile_context>

<pallas_src>
import jax
import jax.numpy as jnp
from jax.experimental import pallas as pl
from jax.experimental.pallas import tpu as pltpu


def _round_up(x, m):
    return (x + m - 1) // m * m


def _layout(in_dim, hidden, out_dim):
    """Static packing layout: 8-row-aligned sections inside one 128-lane buffer."""
    pad = _round_up(max(hidden, out_dim, 128), 128)
    w1_off = 0
    b1_off = w1_off + _round_up(in_dim, 8)
    w2_off = b1_off + 8
    b2_off = w2_off + pad
    w3_off = b2_off + 8
    b3_off = w3_off + pad
    total_rows = b3_off + 8
    return pad, (w1_off, b1_off, w2_off, b2_off, w3_off, b3_off), total_rows


def pack_params(w1, b1, w2, b2, w3, b3):
    """Build the single packed parameter buffer ONCE (call at init, reuse per step)."""
    in_dim, hidden = w1.shape
    out_dim = w3.shape[1]
    pad, (w1o, b1o, w2o, b2o, w3o, b3o), total_rows = _layout(in_dim, hidden, out_dim)

    p = jnp.zeros((total_rows, pad), jnp.float32)
    p = p.at[w1o:w1o + in_dim, :hidden].set(w1.astype(jnp.float32))
    p = p.at[b1o, :hidden].set(b1.reshape(-1).astype(jnp.float32))
    p = p.at[w2o:w2o + hidden, :hidden].set(w2.astype(jnp.float32))
    p = p.at[b2o, :hidden].set(b2.reshape(-1).astype(jnp.float32))
    p = p.at[w3o:w3o + hidden, :out_dim].set(w3.astype(jnp.float32))
    p = p.at[b3o, :out_dim].set(b3.reshape(-1).astype(jnp.float32))
    return p


def make_classifier_mlp_forward(in_dim, hidden, out_dim):
    """Returns a jitted forward(x, packed_params) -> log_softmax logits [n, out_dim]."""
    pad, (w1_off, b1_off, w2_off, b2_off, w3_off, b3_off), _ = _layout(
        in_dim, hidden, out_dim)

    def kernel(x_ref, p_ref, o_ref, *, n, n_pad):
        xv = x_ref[...]                                        # [n_pad, in_dim] f32

        # ---- layer 1: K=in_dim (=2) as VPU broadcast-FMAs, not an MXU pass ----
        h1 = p_ref[b1_off:b1_off + 1, :]                       # [1, pad] bias
        for c in range(in_dim):                                # static unroll
            h1 = h1 + xv[:, c:c + 1] * p_ref[w1_off + c:w1_off + c + 1, :]
        h1 = jnp.maximum(h1, 0.0)                              # [n_pad, pad]

        # ---- layer 2 (MXU, 128-aligned, f32) ----
        h2 = jnp.dot(h1, p_ref[w2_off:w2_off + pad, :],
                     preferred_element_type=jnp.float32)
        h2 = jnp.maximum(h2 + p_ref[b2_off:b2_off + 1, :], 0.0)

        # ---- layer 3 (MXU, 128-aligned, f32) ----
        logits = jnp.dot(h2, p_ref[w3_off:w3_off + pad, :],
                         preferred_element_type=jnp.float32)
        logits = logits + p_ref[b3_off:b3_off + 1, :]          # [n_pad, pad]

        # ---- log_softmax over dim=0 (batch axis), per column ----
        if n_pad != n:  # mask padded rows out of the axis-0 reduction (static branch)
            rows = jax.lax.broadcasted_iota(jnp.int32, (n_pad, pad), 0)
            reduce_src = jnp.where(rows < n, logits, jnp.float32(-jnp.inf))
        else:
            reduce_src = logits
        m = jnp.max(reduce_src, axis=0, keepdims=True)         # [1, pad]
        shifted = logits - m
        lse = jnp.log(jnp.sum(jnp.exp(reduce_src - m), axis=0, keepdims=True))
        o_ref[...] = shifted - lse                             # lane-dense full store

    @jax.jit
    def forward(x, packed):
        n = x.shape[0]
        n_pad = _round_up(max(n, 8), 8)

        x_p = x.astype(jnp.float32)
        if n_pad != n:
            x_p = jnp.pad(x_p, ((0, n_pad - n), (0, 0)))

        vmem = pl.BlockSpec(memory_space=pltpu.VMEM)
        out_padded = pl.pallas_call(
            lambda xr, pr, orf: kernel(xr, pr, orf, n=n, n_pad=n_pad),
            out_shape=jax.ShapeDtypeStruct((n_pad, pad), jnp.float32),
            in_specs=[vmem, vmem],
            out_specs=vmem,
        )(x_p, packed)

        # Slice fuses under jit; callers that tolerate the padded layout can use
        # the padded result directly instead.
        return out_padded[:n, :out_dim]

    return forward


def init_params(key, in_dim, hidden_dim, out_dim):
    # Deterministic synthetic init (PyTorch-Linear-like uniform bounds).
    ks = jax.random.split(key, 6)

    def lin(kw, kb, fan_in, fan_out):
        bound = 1.0 / jnp.sqrt(fan_in)
        w = jax.random.uniform(kw, (fan_in, fan_out), jnp.float32, -bound, bound)
        b = jax.random.uniform(kb, (1, fan_out), jnp.float32, -bound, bound)
        return w, b

    w1, b1 = lin(ks[0], ks[1], in_dim, hidden_dim)
    w2, b2 = lin(ks[2], ks[3], hidden_dim, hidden_dim)
    w3, b3 = lin(ks[4], ks[5], hidden_dim, out_dim)
    return w1, b1, w2, b2, w3, b3


def reference_forward(x, w1, b1, w2, b2, w3, b3):
    h1 = jnp.maximum(x @ w1 + b1, 0.0)
    h2 = jnp.maximum(h1 @ w2 + b2, 0.0)
    logits = h2 @ w3 + b3
    return jax.nn.log_softmax(logits, axis=0)


if __name__ == "__main__":
    # The module reshapes input as (-1, 2) -> in_dim = 2.
    N, IN_DIM, HIDDEN, OUT_DIM = 8, 2, 32, 4

    key = jax.random.PRNGKey(0)
    kx, kp = jax.random.split(key)
    x = jax.random.normal(kx, (N, IN_DIM), jnp.float32)
    params = init_params(kp, IN_DIM, HIDDEN, OUT_DIM)

    # Pack parameters ONCE (init-time), reuse for every forward call.
    packed = jax.block_until_ready(pack_params(*params))

    forward = make_classifier_mlp_forward(IN_DIM, HIDDEN, OUT_DIM)
    out = forward(x, packed)              # jitted: pad + kernel + slice in one program
    out = jax.block_until_ready(out)
    out = jax.block_until_ready(forward(x, packed))  # cached-compile fast path

    ref = reference_forward(x, *params)
    assert out.shape == (N, OUT_DIM)
    assert jnp.allclose(out, ref, atol=1e-5, rtol=1e-5)

    print("KERNEL_OK")
</pallas_src>

<mosaic_0001>
module attributes {stable_mosaic.version = 11 : i64} {
  func.func @_lambda_(%arg0: memref<8x2xf32, #tpu.memory_space<vmem>>, %arg1: memref<288x128xf32, #tpu.memory_space<vmem>>, %arg2: memref<8x128xf32, #tpu.memory_space<vmem>>) attributes {dimension_semantics = [], scalar_prefetch = 0 : i64, scratch_operands = 0 : i64, tpu.core_type = #tpu.core_type<tc>} {
    %c0 = arith.constant 0 : index
    %c0_0 = arith.constant 0 : index
    %0 = vector.load %arg0[%c0, %c0_0] : memref<8x2xf32, #tpu.memory_space<vmem>>, vector<8x2xf32>
    %c8 = arith.constant 8 : index
    %c0_1 = arith.constant 0 : index
    %1 = vector.load %arg1[%c8, %c0_1] : memref<288x128xf32, #tpu.memory_space<vmem>>, vector<1x128xf32>
    %2 = vector.extract_strided_slice %0 {offsets = [0, 0], sizes = [8, 1], strides = [1, 1]} : vector<8x2xf32> to vector<8x1xf32>
    %c0_2 = arith.constant 0 : index
    %c0_3 = arith.constant 0 : index
    %3 = vector.load %arg1[%c0_2, %c0_3] : memref<288x128xf32, #tpu.memory_space<vmem>>, vector<1x128xf32>
    %4 = vector.broadcast %2 : vector<8x1xf32> to vector<8x128xf32>
    %5 = vector.broadcast %3 : vector<1x128xf32> to vector<8x128xf32>
    %6 = arith.mulf %4, %5 : vector<8x128xf32>
    %7 = vector.broadcast %1 : vector<1x128xf32> to vector<8x128xf32>
    %8 = arith.addf %7, %6 : vector<8x128xf32>
    %9 = vector.extract_strided_slice %0 {offsets = [0, 1], sizes = [8, 1], strides = [1, 1]} : vector<8x2xf32> to vector<8x1xf32>
    %c1 = arith.constant 1 : index
    %c0_4 = arith.constant 0 : index
    %10 = vector.load %arg1[%c1, %c0_4] : memref<288x128xf32, #tpu.memory_space<vmem>>, vector<1x128xf32>
    %11 = vector.broadcast %9 : vector<8x1xf32> to vector<8x128xf32>
    %12 = vector.broadcast %10 : vector<1x128xf32> to vector<8x128xf32>
    %13 = arith.mulf %11, %12 : vector<8x128xf32>
    %14 = arith.addf %8, %13 : vector<8x128xf32>
    %cst = arith.constant 0.000000e+00 : f32
    %15 = vector.broadcast %cst : f32 to vector<8x128xf32>
    %16 = arith.maximumf %14, %15 : vector<8x128xf32>
    %c16 = arith.constant 16 : index
    %c0_5 = arith.constant 0 : index
    %17 = vector.load %arg1[%c16, %c0_5] : memref<288x128xf32, #tpu.memory_space<vmem>>, vector<128x128xf32>
    %cst_6 = arith.constant dense<0.000000e+00> : vector<8x128xf32>
    %18 = tpu.matmul %16, %17, %cst_6 {dimension_numbers = #tpu.dot_dimension_numbers<[1], [0], [0], [1], [0, 0, 1, 1], [], []>} : vector<8x128xf32>, vector<128x128xf32>, vector<8x128xf32> -> vector<8x128xf32>
    %c144 = arith.constant 144 : index
    %c0_7 = arith.constant 0 : index
    %19 = vector.load %arg1[%c144, %c0_7] : memref<288x128xf32, #tpu.memory_space<vmem>>, vector<1x128xf32>
    %20 = vector.broadcast %19 : vector<1x128xf32> to vector<8x128xf32>
    %21 = arith.addf %18, %20 : vector<8x128xf32>
    %cst_8 = arith.constant 0.000000e+00 : f32
    %22 = vector.broadcast %cst_8 : f32 to vector<8x128xf32>
    %23 = arith.maximumf %21, %22 : vector<8x128xf32>
    %c152 = arith.constant 152 : index
    %c0_9 = arith.constant 0 : index
    %24 = vector.load %arg1[%c152, %c0_9] : memref<288x128xf32, #tpu.memory_space<vmem>>, vector<128x128xf32>
    %cst_10 = arith.constant dense<0.000000e+00> : vector<8x128xf32>
    %25 = tpu.matmul %23, %24, %cst_10 {dimension_numbers = #tpu.dot_dimension_numbers<[1], [0], [0], [1], [0, 0, 1, 1], [], []>} : vector<8x128xf32>, vector<128x128xf32>, vector<8x128xf32> -> vector<8x128xf32>
    %c280 = arith.constant 280 : index
    %c0_11 = arith.constant 0 : index
    %26 = vector.load %arg1[%c280, %c0_11] : memref<288x128xf32, #tpu.memory_space<vmem>>, vector<1x128xf32>
    %27 = vector.broadcast %26 : vector<1x128xf32> to vector<8x128xf32>
    %28 = arith.addf %25, %27 : vector<8x128xf32>
    %cst_12 = arith.constant dense<0xFF800000> : vector<128xf32>
    %29 = vector.multi_reduction <maximumf>, %28, %cst_12 [0] : vector<8x128xf32> to vector<128xf32>
    %30 = vector.shape_cast %29 : vector<128xf32> to vector<1x128xf32>
    %31 = vector.broadcast %30 : vector<1x128xf32> to vector<8x128xf32>
    %32 = arith.subf %28, %31 : vector<8x128xf32>
    %33 = vector.broadcast %30 : vector<1x128xf32> to vector<8x128xf32>
    %34 = arith.subf %28, %33 : vector<8x128xf32>
    %35 = math.exp %34 : vector<8x128xf32>
    %cst_13 = arith.constant dense<0.000000e+00> : vector<128xf32>
    %36 = vector.multi_reduction <add>, %35, %cst_13 [0] : vector<8x128xf32> to vector<128xf32>
    %37 = vector.shape_cast %36 : vector<128xf32> to vector<1x128xf32>
    %38 = math.log %37 : vector<1x128xf32>
    %39 = vector.broadcast %38 : vector<1x128xf32> to vector<8x128xf32>
    %40 = arith.subf %32, %39 : vector<8x128xf32>
    %c0_14 = arith.constant 0 : index
    %c0_15 = arith.constant 0 : index
    %41 = vector.load %arg2[%c0_14, %c0_15] : memref<8x128xf32, #tpu.memory_space<vmem>>, vector<8x128xf32>
    tpu.vector_store %arg2[%c0_14, %c0_15], %40 {strides = array<i32>} : memref<8x128xf32, #tpu.memory_space<vmem>>, vector<8x128xf32>,
    return
  }
}

</mosaic_0001>

<llo_original>
// kernel: forward.1
$region0: #{forward.1}
  #allocation0 [shape = 'u32[]', space=smem, size = 0x4, offset = 0x4, fixed_abs, tag = 'smem constant byte address 0x4 - core index']
  #allocation1 [shape = 'u32[144,128]{1,0:T(1,128)}', space=vmem, size = 0x12000, scoped, tag = 'internal scratch']
  %s0 = inlined_call_operand.vmem [shape: f32[8,2], index: 0, kind: input, shape index: {}]
  %s1 = inlined_call_operand.hbm [shape: f32[288,128], index: 1, kind: input, shape index: {}]
  %s2 = inlined_call_operand.vmem [shape: f32[8,128], index: 2, kind: output, shape index: {}]
  %s3 = sld [smem:[#allocation0]]
  $region22: #{forward.1} parent=0
    _
  %s5 = ssub.s32 1, %s3
  %s6 = scalar_select 0, %s5, %s3
  $region1: #{forward.1} parent=0
    #allocation2 [shape = 'u8[147456]{0}', space=vmem, size = 0x24000, scoped, tag = 'input window, operand 1, single buffered']
    #allocation3 [shape = 's32[1]{0}', space=sflag, size = 0x4, scoped, tag = 'scoped memory for forward.1']
    %7 = vsyncpa [#allocation3], 0
    // Predicated region
    $region2: #{forward.1} parent=1 // pred_check
      _
    $region3: #{forward.1} parent=1 // pred_check_branch
      %9 = sbr.rel (0) target = $region5
    $region4: #{forward.1} parent=1 // pred_region
      _
    $region5: #{forward.1} parent=1 // pred_fallthru
      _
    // Predicated region
    $region6: #{forward.1} parent=1 // pred_check
      _
    $region7: #{forward.1} parent=1 // pred_check_branch
      %11 = sbr.rel (0) target = $region9
    $region8: #{forward.1} parent=1 // pred_region
      %s13 = ssub.s32 4608, 4608
      %14 = vsyncadd [#allocation3], %s13
      %s15 = sshll.u32 [#allocation2], 4
      %s16 = int_to_ptr.vmem [resolvable:$true] %s15
      %21 = dma.hbm_to_vmem [thread:$0]  %s1, 4608, %s16, [#allocation3], 128, 128, 8
    $region9: #{forward.1} parent=1 // pred_fallthru
      _
    // Predicated region
    $region10: #{forward.1} parent=1 // pred_check
      _
    $region11: #{forward.1} parent=1 // pred_check_branch
      %23 = sbr.rel (0) target = $region13
    $region12: #{forward.1} parent=1 // pred_region
      %24 = dma.done [#allocation3], 4608
    $region13: #{forward.1} parent=1 // pred_fallthru
      _
    %v25 = vld [vmem:[%s0] sm:$0xff]
    %v26 = vld [vmem:[#allocation2 + $0x8] sm:$0x1]
    %v27 = vld [vmem:[#allocation2] sm:$0x1]
    %29 = vset.pattern.permute.xlu0 0
    %30 = vperm.xlu0 %29, %v25
    %v31 = vpop.permute.xlu0 %30
    %v33 = vlaneseq
    %v34 = vshrl.u32 %v33, 7
    %v35 = vsub.s32 0, %v34
    %v36 = vrot.slane %v27, %v35
    %v37 = vmul.f32 %v31, %v36
    %v38 = vlaneseq
    %v39 = vshrl.u32 %v38, 7
    %v40 = vsub.s32 0, %v39
    %v41 = vrot.slane %v26, %v40
    %v42 = vadd.f32 %v41, %v37
    %v43 = vld [vmem:[#allocation2 + $0x1] sm:$0x1]
    %44 = vset.pattern.permute.xlu0 1
    %45 = vperm.xlu0 %44, %v25
    %v46 = vpop.permute.xlu0 %45
    %v48 = vlaneseq
    %v49 = vshrl.u32 %v48, 7
    %v50 = vsub.s32 0, %v49
    %v51 = vrot.slane %v43, %v50
    %v52 = vmul.f32 %v46, %v51
    %v53 = vadd.f32 %v42, %v52
    %v54 = vmax.f32 %v53, 0.0
    %v55 = vld [vmem:[#allocation2 + $0x10] sm:$0xff]
    %v56 = vld [vmem:[#allocation2 + $0x18] sm:$0xff]
    %v57 = vld [vmem:[#allocation2 + $0x20] sm:$0xff]
    %v58 = vld [vmem:[#allocation2 + $0x28] sm:$0xff]
    %v59 = vld [vmem:[#allocation2 + $0x30] sm:$0xff]
    %v60 = vld [vmem:[#allocation2 + $0x38] sm:$0xff]
    %v61 = vld [vmem:[#allocation2 + $0x40] sm:$0xff]
    %v62 = vld [vmem:[#allocation2 + $0x48] sm:$0xff]
    %v63 = vld [vmem:[#allocation2 + $0x50] sm:$0xff]
    %v64 = vld [vmem:[#allocation2 + $0x58] sm:$0xff]
    %v65 = vld [vmem:[#allocation2 + $0x60] sm:$0xff]
    %v66 = vld [vmem:[#allocation2 + $0x68] sm:$0xff]
    %v67 = vld [vmem:[#allocation2 + $0x70] sm:$0xff]
    %v68 = vld [vmem:[#allocation2 + $0x78] sm:$0xff]
    %v69 = vld [vmem:[#allocation2 + $0x80] sm:$0xff]
    %v70 = vld [vmem:[#allocation2 + $0x88] sm:$0xff]
    %v71 = vld [vmem:[#allocation2 + $0x90] sm:$0x1]
    %v72 = vlaneseq
    %v73 = vshrl.u32 %v72, 7
    %v74 = vsub.s32 0, %v73
    %v75 = vrot.slane %v71, %v74
    %76 = vmatprep.subr.mxu0 0.0
    %77 = vmatpush1.msra.mxu0 %v55
    %78 = vmatprep.subr.mxu0 0.0
    %79 = vmatpush1.msra.mxu0 %v56
    %80 = vmatprep.subr.mxu0 0.0
    %81 = vmatpush1.msra.mxu0 %v57
    %82 = vmatprep.subr.mxu0 0.0
    %83 = vmatpush1.msra.mxu0 %v58
    %84 = vmatprep.subr.mxu0 0.0
    %85 = vmatpush1.msra.mxu0 %v59
    %86 = vmatprep.subr.mxu0 0.0
    %87 = vmatpush1.msra.mxu0 %v60
    %88 = vmatprep.subr.mxu0 0.0
    %89 = vmatpush1.msra.mxu0 %v61
    %90 = vmatprep.subr.mxu0 0.0
    %91 = vmatpush1.msra.mxu0 %v62
    %92 = vmatprep.subr.mxu0 0.0
    %93 = vmatpush1.msra.mxu0 %v63
    %94 = vmatprep.subr.mxu0 0.0
    %95 = vmatpush1.msra.mxu0 %v64
    %96 = vmatprep.subr.mxu0 0.0
    %97 = vmatpush1.msra.mxu0 %v65
    %98 = vmatprep.subr.mxu0 0.0
    %99 = vmatpush1.msra.mxu0 %v66
    %100 = vmatprep.subr.mxu0 0.0
    %101 = vmatpush1.msra.mxu0 %v67
    %102 = vmatprep.subr.mxu0 0.0
    %103 = vmatpush1.msra.mxu0 %v68
    %104 = vmatprep.subr.mxu0 0.0
    %105 = vmatpush1.msra.mxu0 %v69
    %106 = vmatprep.subr.mxu0 0.0
    %107 = vmatpush1.msra.mxu0 %v70
    %108 = vmatprep.subr.mxu0 0.0
    %109 = vmatpush1.msra.mxu0 0.0
    %110 = vmatprep.subr.mxu0 0.0
    %111 = vmatpush1.msra.mxu0 0.0
    %112 = vmatprep.subr.mxu0 0.0
    %113 = vmatpush1.msra.mxu0 0.0
    %114 = vmatprep.subr.mxu0 0.0
    %115 = vmatpush1.msra.mxu0 0.0
    %116 = vmatprep.subr.mxu0 0.0
    %117 = vmatpush1.msra.mxu0 0.0
    %118 = vmatprep.subr.mxu0 0.0
    %119 = vmatpush1.msra.mxu0 0.0
    %120 = vmatprep.subr.mxu0 0.0
    %121 = vmatpush1.msra.mxu0 0.0
    %122 = vmatprep.subr.mxu0 0.0
    %123 = vmatpush1.msra.mxu0 0.0
    %124 = vmatprep.subr.mxu0 0.0
    %125 = vmatpush1.msra.mxu0 0.0
    %126 = vmatprep.subr.mxu0 0.0
    %127 = vmatpush1.msra.mxu0 0.0
    %128 = vmatprep.subr.mxu0 0.0
    %129 = vmatpush1.msra.mxu0 0.0
    %130 = vmatprep.subr.mxu0 0.0
    %131 = vmatpush1.msra.mxu0 0.0
    %132 = vmatprep.subr.mxu0 0.0
    %133 = vmatpush1.msra.mxu0 0.0
    %134 = vmatprep.subr.mxu0 0.0
    %135 = vmatpush1.msra.mxu0 0.0
    %136 = vmatprep.subr.mxu0 0.0
    %137 = vmatpush1.msra.mxu0 0.0
    %138 = vmatprep.subr.mxu0 0.0
    %139 = vmatpush1.msra.mxu0 0.0
    %140 = vmatprep.mubr.f32.mxu0 0.0
    %141 = vmatmul.mubr.f32.gmra.mrb[0].mxu0 %v54
    %v142 = vpop.f32.mrb[0].mxu0
    %v143 = vadd.f32 %v75, %v142
    %v144 = vpop.f32.mrb[0].mxu0
    %145 = vdwg.mxu0
    %v146 = vmax.f32 %v143, 0.0
    %v147 = vld [vmem:[#allocation2 + $0x98] sm:$0xff]
    %v148 = vld [vmem:[#allocation2 + $0xa0] sm:$0xff]
    %v149 = vld [vmem:[#allocation2 + $0xa8] sm:$0xff]
    %v150 = vld [vmem:[#allocation2 + $0xb0] sm:$0xff]
    %v151 = vld [vmem:[#allocation2 + $0xb8] sm:$0xff]
    %v152 = vld [vmem:[#allocation2 + $0xc0] sm:$0xff]
    %v153 = vld [vmem:[#allocation2 + $0xc8] sm:$0xff]
    %v154 = vld [vmem:[#allocation2 + $0xd0] sm:$0xff]
    %v155 = vld [vmem:[#allocation2 + $0xd8] sm:$0xff]
    %v156 = vld [vmem:[#allocation2 + $0xe0] sm:$0xff]
    %v157 = vld [vmem:[#allocation2 + $0xe8] sm:$0xff]
    %v158 = vld [vmem:[#allocation2 + $0xf0] sm:$0xff]
    %v159 = vld [vmem:[#allocation2 + $0xf8] sm:$0xff]
    %v160 = vld [vmem:[#allocation2 + $0x100] sm:$0xff]
    %v161 = vld [vmem:[#allocation2 + $0x108] sm:$0xff]
    %v162 = vld [vmem:[#allocation2 + $0x110] sm:$0xff]
    %v163 = vld [vmem:[#allocation2 + $0x118] sm:$0x1]
    %v164 = vlaneseq
    %v165 = vshrl.u32 %v164, 7
    %v166 = vsub.s32 0, %v165
    %v167 = vrot.slane %v163, %v166
    %168 = vmatprep.subr.mxu0 0.0
    %169 = vmatpush1.msra.mxu0 %v147
    %170 = vmatprep.subr.mxu0 0.0
    %171 = vmatpush1.msra.mxu0 %v148
    %172 = vmatprep.subr.mxu0 0.0
    %173 = vmatpush1.msra.mxu0 %v149
    %174 = vmatprep.subr.mxu0 0.0
    %175 = vmatpush1.msra.mxu0 %v150
    %176 = vmatprep.subr.mxu0 0.0
    %177 = vmatpush1.msra.mxu0 %v151
    %178 = vmatprep.subr.mxu0 0.0
    %179 = vmatpush1.msra.mxu0 %v152
    %180 = vmatprep.subr.mxu0 0.0
    %181 = vmatpush1.msra.mxu0 %v153
    %182 = vmatprep.subr.mxu0 0.0
    %183 = vmatpush1.msra.mxu0 %v154
    %184 = vmatprep.subr.mxu0 0.0
    %185 = vmatpush1.msra.mxu0 %v155
    %186 = vmatprep.subr.mxu0 0.0
    %187 = vmatpush1.msra.mxu0 %v156
    %188 = vmatprep.subr.mxu0 0.0
    %189 = vmatpush1.msra.mxu0 %v157
    %190 = vmatprep.subr.mxu0 0.0
    %191 = vmatpush1.msra.mxu0 %v158
    %192 = vmatprep.subr.mxu0 0.0
    %193 = vmatpush1.msra.mxu0 %v159
    %194 = vmatprep.subr.mxu0 0.0
    %195 = vmatpush1.msra.mxu0 %v160
    %196 = vmatprep.subr.mxu0 0.0
    %197 = vmatpush1.msra.mxu0 %v161
    %198 = vmatprep.subr.mxu0 0.0
    %199 = vmatpush1.msra.mxu0 %v162
    %200 = vmatprep.subr.mxu0 0.0
    %201 = vmatpush1.msra.mxu0 0.0
    %202 = vmatprep.subr.mxu0 0.0
    %203 = vmatpush1.msra.mxu0 0.0
    %204 = vmatprep.subr.mxu0 0.0
    %205 = vmatpush1.msra.mxu0 0.0
    %206 = vmatprep.subr.mxu0 0.0
    %207 = vmatpush1.msra.mxu0 0.0
    %208 = vmatprep.subr.mxu0 0.0
    %209 = vmatpush1.msra.mxu0 0.0
    %210 = vmatprep.subr.mxu0 0.0
    %211 = vmatpush1.msra.mxu0 0.0
    %212 = vmatprep.subr.mxu0 0.0
    %213 = vmatpush1.msra.mxu0 0.0
    %214 = vmatprep.subr.mxu0 0.0
    %215 = vmatpush1.msra.mxu0 0.0
    %216 = vmatprep.subr.mxu0 0.0
    %217 = vmatpush1.msra.mxu0 0.0
    %218 = vmatprep.subr.mxu0 0.0
    %219 = vmatpush1.msra.mxu0 0.0
    %220 = vmatprep.subr.mxu0 0.0
    %221 = vmatpush1.msra.mxu0 0.0
    %222 = vmatprep.subr.mxu0 0.0
    %223 = vmatpush1.msra.mxu0 0.0
    %224 = vmatprep.subr.mxu0 0.0
    %225 = vmatpush1.msra.mxu0 0.0
    %226 = vmatprep.subr.mxu0 0.0
    %227 = vmatpush1.msra.mxu0 0.0
    %228 = vmatprep.subr.mxu0 0.0
    %229 = vmatpush1.msra.mxu0 0.0
    %230 = vmatprep.subr.mxu0 0.0
    %231 = vmatpush1.msra.mxu0 0.0
    %232 = vmatprep.mubr.f32.mxu0 0.0
    %233 = vmatmul.mubr.f32.gmra.mrb[0].mxu0 %v146
    %v234 = vpop.f32.mrb[0].mxu0
    %v235 = vadd.f32 %v167, %v234
    %v236 = vpop.f32.mrb[0].mxu0
    %237 = vdwg.mxu0
    %v238 = vrot.slane %v235, 4
    %v239 = vmax.f32 %v235, %v238
    %v240 = vrot.slane %v239, 2
    %v241 = vmax.f32 %v239, %v240
    %v242 = vrot.slane %v241, 1
    %v243 = vmax.f32 %v241, %v242
    %v244 = vsub.f32 %v235, %v243
    %v245 = vmul.f32 %v244, 1.442695
    %v246 = vpow.pop %v245
    %v247 = vrot.slane %v246, 4
    %v248 = vadd.f32 %v246, %v247
    %v249 = vrot.slane %v248, 2
    %v250 = vadd.f32 %v248, %v249
    %v251 = vrot.slane %v250, 1
    %v252 = vadd.f32 %v250, %v251
    %v253 = vlog2.pop %v252
    %v254 = vmul.f32 %v253, 0.6931472
    %v255 = vsub.f32 %v244, %v254
    %256 = vst [vmem:[%s2] sm:$0xff] %v255
    // Predicated region
    $region14: #{forward.1} parent=1 // pred_check
      _
    $region15: #{forward.1} parent=1 // pred_check_branch
      %258 = sbr.rel (0) target = $region17
    $region16: #{forward.1} parent=1 // pred_region
      _
    $region17: #{forward.1} parent=1 // pred_fallthru
      _
    // Predicated region
    $region18: #{forward.1} parent=1 // pred_check
      _
    $region19: #{forward.1} parent=1 // pred_check_branch
      %260 = sbr.rel (0) target = $region21
    $region20: #{forward.1} parent=1 // pred_region
      _
    $region21: #{forward.1} parent=1 // pred_fallthru
      _
    %261 = vsyncpa [#allocation3], 1

</llo_original>
